<compile_context>
chip_gen: v7x
topology: tpu7x:2x2x1
jax: 0.10.0
libtpu: 0.0.40
codegen_flags: <defaults>
</compile_context>

<pallas_src>
import jax
import jax.numpy as jnp
from jax.experimental import pallas as pl
from jax.experimental.pallas import tpu as pltpu


def _round_up(n, m=128):
    return max(m, ((n + m - 1) // m) * m)


def _mlp_kernel(x_ref, w1_ref, b1_ref, w2_ref, b2_ref, w3_ref, b3_ref, o_ref):
    # x_ref : (TB, LFP)  f32    (preprocess folded into w1; cast to bf16 here)
    # wN    : (K, N)     bf16   pre-transposed, zero-padded to 128 multiples
    # bN    : (1, N)     f32    zero-padded
    # o_ref : (TB, CP)   f32    lane-padded output slab (CP multiple of 128)
    x = x_ref[...].astype(w1_ref.dtype)                                # free VPU cast

    h1 = jnp.dot(x, w1_ref[...], preferred_element_type=jnp.float32) + b1_ref[...]
    h1 = jnp.maximum(h1, 0.0)                                          # (TB, H1P) f32

    h2 = jnp.dot(h1.astype(w2_ref.dtype), w2_ref[...],
                 preferred_element_type=jnp.float32) + b2_ref[...]
    h2 = jnp.maximum(h2, 0.0)                                          # (TB, H2P) f32

    out = jnp.dot(h2.astype(w3_ref.dtype), w3_ref[...],
                  preferred_element_type=jnp.float32) + b3_ref[...]
    o_ref[...] = out.astype(o_ref.dtype)                               # (TB, CP)


def prepare_kernel_params(params, compute_dtype=jnp.bfloat16, lane_pad=128):
    """Fold preprocess into W1, pre-transpose weights, zero-pad all dims to 128.

    `params` holds PyTorch-convention tensors:
      pw: (1, L), w1: (H1, F), b1: (1, H1), w2: (H2, H1), b2: (1, H2),
      w3: (C, H2), b3: (1, C)
    Zero-padding of weight rows/cols and biases is exact: padded hidden
    columns evaluate to relu(0) = 0 and contribute nothing downstream.
    """
    pw = params["pw"]
    w1, b1 = params["w1"], params["b1"]
    w2, b2 = params["w2"], params["b2"]
    w3, b3 = params["w3"], params["b3"]

    L = pw.shape[1]
    H1, F = w1.shape
    H2 = w2.shape[0]
    C = w3.shape[0]
    LF = L * F
    LFP = _round_up(LF, lane_pad)
    H1P = _round_up(H1, lane_pad)
    H2P = _round_up(H2, lane_pad)
    CP = _round_up(C, lane_pad)

    # Fold the layer weighting: W1p[l*F + f, h] = pw[l] * W1[h, f]
    w1p = (pw[0][:, None, None] * w1.T[None, :, :]).reshape(LF, H1)
    w1p = jnp.pad(w1p, ((0, LFP - LF), (0, H1P - H1)))
    w2p = jnp.pad(w2.T, ((0, H1P - H1), (0, H2P - H2)))
    w3p = jnp.pad(w3.T, ((0, H2P - H2), (0, CP - C)))
    b1p = jnp.pad(b1, ((0, 0), (0, H1P - H1)))
    b2p = jnp.pad(b2, ((0, 0), (0, H2P - H2)))
    b3p = jnp.pad(b3, ((0, 0), (0, CP - C)))

    return {
        "w1": w1p.astype(compute_dtype), "b1": b1p.astype(jnp.float32),
        "w2": w2p.astype(compute_dtype), "b2": b2p.astype(jnp.float32),
        "w3": w3p.astype(compute_dtype), "b3": b3p.astype(jnp.float32),
        "L": L, "F": F, "LF": LF, "LFP": LFP,
        "H1": H1, "H2": H2, "C": C, "CP": CP,
    }


def aesthetic_predictor_forward(x, kp, *, tb=None):
    """x: (B, L, F) float32. kp: output of prepare_kernel_params."""
    B, L, F = x.shape
    assert L == kp["L"] and F == kp["F"]
    LF, LFP = kp["LF"], kp["LFP"]
    H1, H2, C, CP = kp["H1"], kp["H2"], kp["C"], kp["CP"]

    if tb is None:
        # Keep >=2 steps along the 'parallel' batch axis when B allows it
        # (v7x has 2 TensorCores); cap the tile so VMEM stays tiny.
        half = _round_up((B + 1) // 2, 128)
        tb = int(min(max(half, 128), 1024))

    nb = pl.cdiv(B, tb)
    Bp = nb * tb

    # One pad handles both the batch pad and the K pad of layer 1.
    # x stays f32; the bf16 cast happens inside the kernel.
    x2d = x.reshape(B, LF)
    if Bp != B or LFP != LF:
        x2d = jnp.pad(x2d, ((0, Bp - B), (0, LFP - LF)))

    # CostEstimate uses real (unpadded) layer sizes (advisory only).
    flops = 2 * B * (LF * H1 + H1 * H2 + H2 * C)
    bytes_accessed = (
        Bp * LFP * 4
        + sum(kp[k].size * kp[k].dtype.itemsize
              for k in ("w1", "b1", "w2", "b2", "w3", "b3"))
        + Bp * CP * 4)

    def weight_spec(arr):  # whole-array block, resident across grid steps
        return pl.BlockSpec(arr.shape, lambda i: (0, 0))

    out_padded = pl.pallas_call(
        _mlp_kernel,
        out_shape=jax.ShapeDtypeStruct((Bp, CP), jnp.float32),
        grid=(nb,),
        in_specs=[
            pl.BlockSpec((tb, LFP), lambda i: (i, 0)),
            weight_spec(kp["w1"]), weight_spec(kp["b1"]),
            weight_spec(kp["w2"]), weight_spec(kp["b2"]),
            weight_spec(kp["w3"]), weight_spec(kp["b3"]),
        ],
        out_specs=pl.BlockSpec((tb, CP), lambda i: (i, 0)),
        compiler_params=pltpu.CompilerParams(
            dimension_semantics=("parallel",)),
        cost_estimate=pl.CostEstimate(
            flops=flops, transcendentals=0, bytes_accessed=bytes_accessed),
    )(x2d, kp["w1"], kp["b1"], kp["w2"], kp["b2"], kp["w3"], kp["b3"])

    # Padded batch rows contain relu(bias)-driven garbage; slice them off.
    return out_padded[:B, :C]


def make_params(key, n_layers, n_features, hidden_sizes, out_channels):
    """Deterministic synthetic parameters (PyTorch Linear shapes: (out, in))."""
    ks = jax.random.split(key, 8)
    h1, h2 = hidden_sizes
    return {
        "pw": jax.random.normal(ks[0], (1, n_layers), jnp.float32) * 0.5,
        "w1": jax.random.normal(ks[1], (h1, n_features), jnp.float32) * 0.1,
        "b1": jax.random.normal(ks[2], (1, h1), jnp.float32) * 0.1,
        "w2": jax.random.normal(ks[3], (h2, h1), jnp.float32) * 0.1,
        "b2": jax.random.normal(ks[4], (1, h2), jnp.float32) * 0.1,
        "w3": jax.random.normal(ks[5], (out_channels, h2), jnp.float32) * 0.1,
        "b3": jax.random.normal(ks[6], (1, out_channels), jnp.float32) * 0.1,
    }


def reference_forward(x, p):
    """Pure-JAX f32 reference mirroring the PyTorch module (inference)."""
    xp = jnp.einsum("blf,l->bf", x, p["pw"][0])                 # preprocess + reshape
    h = jnp.maximum(xp @ p["w1"].T + p["b1"][0], 0.0)
    h = jnp.maximum(h @ p["w2"].T + p["b2"][0], 0.0)
    return h @ p["w3"].T + p["b3"][0]


if __name__ == "__main__":
    # Shapes consistent with the module:
    #   weight_n_output_layers = 3, number_of_features = 32,
    #   layers = [64, 32], output_channels = 1, final_layer_bias = True
    B, L, F = 256, 3, 32
    HIDDEN = (64, 32)
    OUT = 1

    key = jax.random.PRNGKey(0)
    kx, kparam = jax.random.split(key)
    x = jax.random.normal(kx, (B, L, F), jnp.float32)
    params = make_params(kparam, L, F, HIDDEN, OUT)
    kp = prepare_kernel_params(params)

    y = aesthetic_predictor_forward(x, kp)   # tb auto -> 128, grid=(2,)
    y = jax.block_until_ready(y)

    y_ref = reference_forward(x, params)
    assert y.shape == (B, OUT)
    max_err = float(jnp.max(jnp.abs(y - y_ref)))
    # bf16 matmul operands with f32 accumulation -> loose tolerance vs f32 ref.
    assert max_err < 5e-2, f"mismatch vs reference: max abs err {max_err}"

    print("KERNEL_OK")
</pallas_src>

<mosaic_0001>
module attributes {stable_mosaic.version = 11 : i64} {
  func.func @_mlp_kernel(%arg0: i32, %arg1: memref<128x128xf32, #tpu.memory_space<vmem>>, %arg2: memref<128x128xbf16, #tpu.memory_space<vmem>>, %arg3: memref<1x128xf32, #tpu.memory_space<vmem>>, %arg4: memref<128x128xbf16, #tpu.memory_space<vmem>>, %arg5: memref<1x128xf32, #tpu.memory_space<vmem>>, %arg6: memref<128x128xbf16, #tpu.memory_space<vmem>>, %arg7: memref<1x128xf32, #tpu.memory_space<vmem>>, %arg8: memref<128x128xf32, #tpu.memory_space<vmem>>) attributes {dimension_semantics = [#tpu.dimension_semantics<parallel>], iteration_bounds = array<i64: 2>, scalar_prefetch = 0 : i64, scratch_operands = 0 : i64, tpu.core_type = #tpu.core_type<tc>, window_params = [{transform_indices = @transform_0, window_bounds = array<i64: 128, 128>}, {pipeline_mode = #tpu.pipeline_mode<synchronous>, transform_indices = @transform_1, window_bounds = array<i64: 128, 128>}, {pipeline_mode = #tpu.pipeline_mode<synchronous>, transform_indices = @transform_2, window_bounds = array<i64: 1, 128>}, {pipeline_mode = #tpu.pipeline_mode<synchronous>, transform_indices = @transform_3, window_bounds = array<i64: 128, 128>}, {pipeline_mode = #tpu.pipeline_mode<synchronous>, transform_indices = @transform_4, window_bounds = array<i64: 1, 128>}, {pipeline_mode = #tpu.pipeline_mode<synchronous>, transform_indices = @transform_5, window_bounds = array<i64: 128, 128>}, {pipeline_mode = #tpu.pipeline_mode<synchronous>, transform_indices = @transform_6, window_bounds = array<i64: 1, 128>}, {transform_indices = @transform_7, window_bounds = array<i64: 128, 128>}]} {
    %c0 = arith.constant 0 : index
    %c0_0 = arith.constant 0 : index
    %0 = vector.load %arg1[%c0, %c0_0] : memref<128x128xf32, #tpu.memory_space<vmem>>, vector<128x128xf32>
    %1 = arith.truncf %0 : vector<128x128xf32> to vector<128x128xbf16>
    %c0_1 = arith.constant 0 : index
    %c0_2 = arith.constant 0 : index
    %2 = vector.load %arg2[%c0_1, %c0_2] : memref<128x128xbf16, #tpu.memory_space<vmem>>, vector<128x128xbf16>
    %cst = arith.constant dense<0.000000e+00> : vector<128x128xf32>
    %3 = tpu.matmul %1, %2, %cst {dimension_numbers = #tpu.dot_dimension_numbers<[1], [0], [0], [1], [0, 0, 1, 1], [], []>} : vector<128x128xbf16>, vector<128x128xbf16>, vector<128x128xf32> -> vector<128x128xf32>
    %c0_3 = arith.constant 0 : index
    %c0_4 = arith.constant 0 : index
    %4 = vector.load %arg3[%c0_3, %c0_4] : memref<1x128xf32, #tpu.memory_space<vmem>>, vector<1x128xf32>
    %5 = vector.broadcast %4 : vector<1x128xf32> to vector<128x128xf32>
    %6 = arith.addf %3, %5 : vector<128x128xf32>
    %cst_5 = arith.constant 0.000000e+00 : f32
    %7 = vector.broadcast %cst_5 : f32 to vector<128x128xf32>
    %8 = arith.maximumf %6, %7 : vector<128x128xf32>
    %9 = arith.truncf %8 : vector<128x128xf32> to vector<128x128xbf16>
    %c0_6 = arith.constant 0 : index
    %c0_7 = arith.constant 0 : index
    %10 = vector.load %arg4[%c0_6, %c0_7] : memref<128x128xbf16, #tpu.memory_space<vmem>>, vector<128x128xbf16>
    %cst_8 = arith.constant dense<0.000000e+00> : vector<128x128xf32>
    %11 = tpu.matmul %9, %10, %cst_8 {dimension_numbers = #tpu.dot_dimension_numbers<[1], [0], [0], [1], [0, 0, 1, 1], [], []>} : vector<128x128xbf16>, vector<128x128xbf16>, vector<128x128xf32> -> vector<128x128xf32>
    %c0_9 = arith.constant 0 : index
    %c0_10 = arith.constant 0 : index
    %12 = vector.load %arg5[%c0_9, %c0_10] : memref<1x128xf32, #tpu.memory_space<vmem>>, vector<1x128xf32>
    %13 = vector.broadcast %12 : vector<1x128xf32> to vector<128x128xf32>
    %14 = arith.addf %11, %13 : vector<128x128xf32>
    %cst_11 = arith.constant 0.000000e+00 : f32
    %15 = vector.broadcast %cst_11 : f32 to vector<128x128xf32>
    %16 = arith.maximumf %14, %15 : vector<128x128xf32>
    %17 = arith.truncf %16 : vector<128x128xf32> to vector<128x128xbf16>
    %c0_12 = arith.constant 0 : index
    %c0_13 = arith.constant 0 : index
    %18 = vector.load %arg6[%c0_12, %c0_13] : memref<128x128xbf16, #tpu.memory_space<vmem>>, vector<128x128xbf16>
    %cst_14 = arith.constant dense<0.000000e+00> : vector<128x128xf32>
    %19 = tpu.matmul %17, %18, %cst_14 {dimension_numbers = #tpu.dot_dimension_numbers<[1], [0], [0], [1], [0, 0, 1, 1], [], []>} : vector<128x128xbf16>, vector<128x128xbf16>, vector<128x128xf32> -> vector<128x128xf32>
    %c0_15 = arith.constant 0 : index
    %c0_16 = arith.constant 0 : index
    %20 = vector.load %arg7[%c0_15, %c0_16] : memref<1x128xf32, #tpu.memory_space<vmem>>, vector<1x128xf32>
    %21 = vector.broadcast %20 : vector<1x128xf32> to vector<128x128xf32>
    %22 = arith.addf %19, %21 : vector<128x128xf32>
    %c0_17 = arith.constant 0 : index
    %c0_18 = arith.constant 0 : index
    %23 = vector.load %arg8[%c0_17, %c0_18] : memref<128x128xf32, #tpu.memory_space<vmem>>, vector<128x128xf32>
    tpu.vector_store %arg8[%c0_17, %c0_18], %22 {strides = array<i32>} : memref<128x128xf32, #tpu.memory_space<vmem>>, vector<128x128xf32>,
    return
  }
  func.func @transform_0(%arg0: i32) -> (i32, i32) {
    %c0_i32 = arith.constant 0 : i32
    %c0_i32_0 = arith.constant 0 : i32
    return %arg0, %c0_i32 : i32, i32
  }
  func.func @transform_1(%arg0: i32) -> (i32, i32) {
    %c0_i32 = arith.constant 0 : i32
    %c0_i32_0 = arith.constant 0 : i32
    %c0_i32_1 = arith.constant 0 : i32
    return %c0_i32, %c0_i32_0 : i32, i32
  }
  func.func @transform_2(%arg0: i32) -> (i32, i32) {
    %c0_i32 = arith.constant 0 : i32
    %c0_i32_0 = arith.constant 0 : i32
    %c0_i32_1 = arith.constant 0 : i32
    return %c0_i32, %c0_i32_0 : i32, i32
  }
  func.func @transform_3(%arg0: i32) -> (i32, i32) {
    %c0_i32 = arith.constant 0 : i32
    %c0_i32_0 = arith.constant 0 : i32
    %c0_i32_1 = arith.constant 0 : i32
    return %c0_i32, %c0_i32_0 : i32, i32
  }
  func.func @transform_4(%arg0: i32) -> (i32, i32) {
    %c0_i32 = arith.constant 0 : i32
    %c0_i32_0 = arith.constant 0 : i32
    %c0_i32_1 = arith.constant 0 : i32
    return %c0_i32, %c0_i32_0 : i32, i32
  }
  func.func @transform_5(%arg0: i32) -> (i32, i32) {
    %c0_i32 = arith.constant 0 : i32
    %c0_i32_0 = arith.constant 0 : i32
    %c0_i32_1 = arith.constant 0 : i32
    return %c0_i32, %c0_i32_0 : i32, i32
  }
  func.func @transform_6(%arg0: i32) -> (i32, i32) {
    %c0_i32 = arith.constant 0 : i32
    %c0_i32_0 = arith.constant 0 : i32
    %c0_i32_1 = arith.constant 0 : i32
    return %c0_i32, %c0_i32_0 : i32, i32
  }
  func.func @transform_7(%arg0: i32) -> (i32, i32) {
    %c0_i32 = arith.constant 0 : i32
    %c0_i32_0 = arith.constant 0 : i32
    return %arg0, %c0_i32 : i32, i32
  }
}

</mosaic_0001>

<llo_original>
// kernel: tpu_custom_call.1
$region0: #{tpu_custom_call.1}
  #allocation0 [shape = 'u32[]', space=smem, size = 0x4, offset = 0x4, fixed_abs, tag = 'smem constant byte address 0x4 - core index']
  #allocation1 [shape = 'u32[144,128]{1,0:T(1,128)}', space=vmem, size = 0x12000, scoped, tag = 'internal scratch']
  %s0 = inlined_call_operand.hbm [shape: f32[256,128], index: 0, kind: input, shape index: {}]
  %s1 = inlined_call_operand.hbm [shape: bf16[128,128], index: 1, kind: input, shape index: {}]
  %s2 = inlined_call_operand.vmem [shape: f32[1,128], index: 2, kind: input, shape index: {}]
  %s3 = inlined_call_operand.hbm [shape: bf16[128,128], index: 3, kind: input, shape index: {}]
  %s4 = inlined_call_operand.vmem [shape: f32[1,128], index: 4, kind: input, shape index: {}]
  %s5 = inlined_call_operand.hbm [shape: bf16[128,128], index: 5, kind: input, shape index: {}]
  %s6 = inlined_call_operand.vmem [shape: f32[1,128], index: 6, kind: input, shape index: {}]
  %s7 = inlined_call_operand.hbm [shape: f32[256,128], index: 7, kind: output, shape index: {}]
  %s8 = sld [smem:[#allocation0]]
  $region77: #{tpu_custom_call.1} parent=0
    _
  %s10 = ssub.s32 1, %s8
  %s11 = scalar_select 0, %s10, %s8
  $region1: #{tpu_custom_call.1} parent=0
    #allocation2 [shape = 'u8[131072]{0}', space=vmem, size = 0x20000, scoped, tag = 'input window, operand 0']
    #allocation3 [shape = 's32[2]{0}', space=sflag, size = 0x8, scoped, tag = 'scoped memory for tpu_custom_call.1']
    #allocation4 [shape = 's32[2]{0}', space=sflag, size = 0x8, scoped, tag = 'scoped memory for tpu_custom_call.1']
    #allocation5 [shape = 'u8[32768]{0}', space=vmem, size = 0x8000, scoped, tag = 'input window, operand 1, single buffered']
    #allocation6 [shape = 's32[1]{0}', space=sflag, size = 0x4, scoped, tag = 'scoped memory for tpu_custom_call.1']
    #allocation7 [shape = 'u8[32768]{0}', space=vmem, size = 0x8000, scoped, tag = 'input window, operand 3, single buffered']
    #allocation8 [shape = 'u8[32768]{0}', space=vmem, size = 0x8000, scoped, tag = 'input window, operand 5, single buffered']
    #allocation9 [shape = 's32[1]{0}', space=sflag, size = 0x4, scoped, tag = 'scoped memory for tpu_custom_call.1']
    #allocation10 [shape = 'u8[131072]{0}', space=vmem, size = 0x20000, scoped, tag = 'output window, operand 0']
    %12 = vsyncpa [#allocation3], 0
    %s13 = scalar_lea.sflag [#allocation3], 1
    %14 = vsyncpa %s13, 0
    %15 = vsyncpa [#allocation6], 0
    %16 = vsyncpa [#allocation9], 0
    %17 = vsyncpa [#allocation4], 0
    %s18 = scalar_lea.sflag [#allocation4], 1
    %19 = vsyncpa %s18, 0
    loop: start=0, step=1, limit=4
    $region2: #{tpu_custom_call.1} parent=1 // loop_pre_header
      _
    $region3: #{tpu_custom_call.1} parent=1 // loop_header
      %s21 = sphi 0, %s25
      %p22 = scmp.ge.s32.totalorder %s21, 4
      %s31 = sphi 0, %s33
      %s34 = sphi 0, %s31
      %s35 = sphi 0, %s34
      %s51 = sphi 0, %s35
      %s55 = sphi 0, %s55
      %s57 = sphi 0, %s55
      %s58 = sphi 0, %s57
      %s72 = sphi 0, %s58
      %s76 = sphi 0, %s76
      %s78 = sphi 0, %s76
      %s79 = sphi 0, %s78
      %s93 = sphi 0, %s79
      %s97 = sphi 0, %s97
      %s99 = sphi 0, %s97
      %s100 = sphi 0, %s99
      %s114 = sphi 0, %s100
      %s118 = sphi 0, %s118
      %s120 = sphi 0, %s118
      %s121 = sphi 0, %s120
      %s135 = sphi 0, %s121
      %s139 = sphi 0, %s139
      %s141 = sphi 0, %s139
      %s142 = sphi 0, %s141
      %s156 = sphi 0, %s142
      %s160 = sphi 0, %s160
      %s162 = sphi 0, %s160
      %s163 = sphi 0, %s162
      %s177 = sphi 0, %s163
      %s183 = sphi 0, %s185
      %s186 = sphi 0, %s183
      %s187 = sphi 0, %s186
      %s203 = sphi 0, %s187
    $region4: #{tpu_custom_call.1} parent=1 // loop_header_branch
      %24 = sbr.rel (%p22) target = $region8
    $region5: #{tpu_custom_call.1} parent=1 // loop_body
      %s26 = ssub.s32 %s21, 1
      %s27 = ssub.s32 %s21, 2
      %s28 = sadd.s32 %s21, 1
      %s29 = ssub.s32 %s21, %s28
      %p30 = scmp.eq.s32.totalorder %s29, 0
      %s32 = sadd.s32 %s31, 1
      %s33 = scalar_select %p30, %s31, %s32
      %p36 = pneg %p30
      %p37 = scmp.eq.s32.totalorder %s21, 1
      %p38 = por %p36, %p37
      %p39 = scmp.ne.s32.totalorder %s31, %s34
      %p40 = scmp.eq.s32.totalorder %s21, 0
      %p41 = por %p39, %p40
      %p42 = scmp.ne.s32.totalorder %s31, %s34
      %p43 = scmp.eq.s32.totalorder %s26, 1
      %p44 = por %p42, %p43
      %p45 = scmp.ne.s32.totalorder %s34, %s35
      %p46 = scmp.eq.s32.totalorder %s26, 0
      %p47 = por %p45, %p46
      %p48 = scmp.ne.s32.totalorder %s34, %s35
      %p49 = scmp.eq.s32.totalorder %s27, 1
      %p50 = por %p48, %p49
      %p52 = scmp.ne.s32.totalorder %s35, %s51
      %p53 = scmp.eq.s32.totalorder %s27, 0
      %p54 = por %p52, %p53
      %s56 = sadd.s32 %s55, 1
      %p59 = scmp.eq.s32.totalorder %s21, 1
      %p60 = scmp.ne.s32.totalorder %s55, %s57
      %p61 = scmp.eq.s32.totalorder %s21, 0
      %p62 = por %p60, %p61
      %p63 = scmp.ne.s32.totalorder %s55, %s57
      %p64 = scmp.eq.s32.totalorder %s26, 1
      %p65 = por %p63, %p64
      %p66 = scmp.ne.s32.totalorder %s57, %s58
      %p67 = scmp.eq.s32.totalorder %s26, 0
      %p68 = por %p66, %p67
      %p69 = scmp.ne.s32.totalorder %s57, %s58
      %p70 = scmp.eq.s32.totalorder %s27, 1
      %p71 = por %p69, %p70
      %p73 = scmp.ne.s32.totalorder %s58, %s72
      %p74 = scmp.eq.s32.totalorder %s27, 0
      %p75 = por %p73, %p74
      %s77 = sadd.s32 %s76, 1
      %p80 = scmp.eq.s32.totalorder %s21, 1
      %p81 = scmp.ne.s32.totalorder %s76, %s78
      %p82 = scmp.eq.s32.totalorder %s21, 0
      %p83 = por %p81, %p82
      %p84 = scmp.ne.s32.totalorder %s76, %s78
      %p85 = scmp.eq.s32.totalorder %s26, 1
      %p86 = por %p84, %p85
      %p87 = scmp.ne.s32.totalorder %s78, %s79
      %p88 = scmp.eq.s32.totalorder %s26, 0
      %p89 = por %p87, %p88
      %p90 = scmp.ne.s32.totalorder %s78, %s79
      %p91 = scmp.eq.s32.totalorder %s27, 1
      %p92 = por %p90, %p91
      %p94 = scmp.ne.s32.totalorder %s79, %s93
      %p95 = scmp.eq.s32.totalorder %s27, 0
      %p96 = por %p94, %p95
      %s98 = sadd.s32 %s97, 1
      %p101 = scmp.eq.s32.totalorder %s21, 1
      %p102 = scmp.ne.s32.totalorder %s97, %s99
      %p103 = scmp.eq.s32.totalorder %s21, 0
      %p104 = por %p102, %p103
      %p105 = scmp.ne.s32.totalorder %s97, %s99
      %p106 = scmp.eq.s32.totalorder %s26, 1
      %p107 = por %p105, %p106
      %p108 = scmp.ne.s32.totalorder %s99, %s100
      %p109 = scmp.eq.s32.totalorder %s26, 0
      %p110 = por %p108, %p109
      %p111 = scmp.ne.s32.totalorder %s99, %s100
      %p112 = scmp.eq.s32.totalorder %s27, 1
      %p113 = por %p111, %p112
      %p115 = scmp.ne.s32.totalorder %s100, %s114
      %p116 = scmp.eq.s32.totalorder %s27, 0
      %p117 = por %p115, %p116
      %s119 = sadd.s32 %s118, 1
      %p122 = scmp.eq.s32.totalorder %s21, 1
      %p123 = scmp.ne.s32.totalorder %s118, %s120
      %p124 = scmp.eq.s32.totalorder %s21, 0
      %p125 = por %p123, %p124
      %p126 = scmp.ne.s32.totalorder %s118, %s120
      %p127 = scmp.eq.s32.totalorder %s26, 1
      %p128 = por %p126, %p127
      %p129 = scmp.ne.s32.totalorder %s120, %s121
      %p130 = scmp.eq.s32.totalorder %s26, 0
      %p131 = por %p129, %p130
      %p132 = scmp.ne.s32.totalorder %s120, %s121
      %p133 = scmp.eq.s32.totalorder %s27, 1
      %p134 = por %p132, %p133
      %p136 = scmp.ne.s32.totalorder %s121, %s135
      %p137 = scmp.eq.s32.totalorder %s27, 0
      %p138 = por %p136, %p137
      %s140 = sadd.s32 %s139, 1
      %p143 = scmp.eq.s32.totalorder %s21, 1
      %p144 = scmp.ne.s32.totalorder %s139, %s141
      %p145 = scmp.eq.s32.totalorder %s21, 0
      %p146 = por %p144, %p145
      %p147 = scmp.ne.s32.totalorder %s139, %s141
      %p148 = scmp.eq.s32.totalorder %s26, 1
      %p149 = por %p147, %p148
      %p150 = scmp.ne.s32.totalorder %s141, %s142
      %p151 = scmp.eq.s32.totalorder %s26, 0
      %p152 = por %p150, %p151
      %p153 = scmp.ne.s32.totalorder %s141, %s142
      %p154 = scmp.eq.s32.totalorder %s27, 1
      %p155 = por %p153, %p154
      %p157 = scmp.ne.s32.totalorder %s142, %s156
      %p158 = scmp.eq.s32.totalorder %s27, 0
      %p159 = por %p157, %p158
      %s161 = sadd.s32 %s160, 1
      %p164 = scmp.eq.s32.totalorder %s21, 1
      %p165 = scmp.ne.s32.totalorder %s160, %s162
      %p166 = scmp.eq.s32.totalorder %s21, 0
      %p167 = por %p165, %p166
      %p168 = scmp.ne.s32.totalorder %s160, %s162
      %p169 = scmp.eq.s32.totalorder %s26, 1
      %p170 = por %p168, %p169
      %p171 = scmp.ne.s32.totalorder %s162, %s163
      %p172 = scmp.eq.s32.totalorder %s26, 0
      %p173 = por %p171, %p172
      %p174 = scmp.ne.s32.totalorder %s162, %s163
      %p175 = scmp.eq.s32.totalorder %s27, 1
      %p176 = por %p174, %p175
      %p178 = scmp.ne.s32.totalorder %s163, %s177
      %p179 = scmp.eq.s32.totalorder %s27, 0
      %p180 = por %p178, %p179
      %s181 = ssub.s32 %s21, %s28
      %p182 = scmp.eq.s32.totalorder %s181, 0
      %s184 = sadd.s32 %s183, 1
      %s185 = scalar_select %p182, %s183, %s184
      %p188 = pneg %p182
      %p189 = scmp.eq.s32.totalorder %s21, 1
      %p190 = por %p188, %p189
      %p191 = scmp.ne.s32.totalorder %s183, %s186
      %p192 = scmp.eq.s32.totalorder %s21, 0
      %p193 = por %p191, %p192
      %p194 = scmp.ne.s32.totalorder %s183, %s186
      %p195 = scmp.eq.s32.totalorder %s26, 1
      %p196 = por %p194, %p195
      %p197 = scmp.ne.s32.totalorder %s186, %s187
      %p198 = scmp.eq.s32.totalorder %s26, 0
      %p199 = por %p197, %p198
      %p200 = scmp.ne.s32.totalorder %s186, %s187
      %p201 = scmp.eq.s32.totalorder %s27, 1
      %p202 = por %p200, %p201
      %p204 = scmp.ne.s32.totalorder %s187, %s203
      %p205 = scmp.eq.s32.totalorder %s27, 0
      %p206 = por %p204, %p205
      %p207 = scmp.le.s32.totalorder 1, %s21
      %p208 = scmp.lt.s32.totalorder %s21, 3
      %p209 = pnand %p207, %p208
      %p210 = pneg %p209
      // Predicated region
      $region9: #{tpu_custom_call.1} parent=5 // pred_check
        _
      $region10: #{tpu_custom_call.1} parent=5 // pred_check_branch
        %212 = sbr.rel (%p209) target = $region12
      $region11: #{tpu_custom_call.1} parent=5 // pred_region
        %s213 = ssub.s32 %s21, 1
        // Predicated region
        $region13: #{tpu_custom_call.1} parent=11 // pred_check
          %p214 = pneg %p68
        $region14: #{tpu_custom_call.1} parent=11 // pred_check_branch
          %216 = sbr.rel (%p214) target = $region16
        $region15: #{tpu_custom_call.1} parent=11 // pred_region
          %s218 = ssub.s32 1024, 1024
          %219 = vsyncadd [#allocation6], %s218
          %s220 = sshll.u32 [#allocation5], 4
          %s221 = int_to_ptr.vmem [resolvable:$true] %s220
          %226 = dma.hbm_to_vmem [thread:$0]  %s1, 1024, %s221, [#allocation6], 64, 64, 4
        $region16: #{tpu_custom_call.1} parent=11 // pred_fallthru
          _
        // Predicated region
        $region17: #{tpu_custom_call.1} parent=11 // pred_check
          %p227 = pneg %p89
        $region18: #{tpu_custom_call.1} parent=11 // pred_check_branch
          %229 = sbr.rel (%p227) target = $region20
        $region19: #{tpu_custom_call.1} parent=11 // pred_region
          _
        $region20: #{tpu_custom_call.1} parent=11 // pred_fallthru
          _
        // Predicated region
        $region21: #{tpu_custom_call.1} parent=11 // pred_check
          %p230 = pneg %p110
        $region22: #{tpu_custom_call.1} parent=11 // pred_check_branch
          %232 = sbr.rel (%p230) target = $region24
        $region23: #{tpu_custom_call.1} parent=11 // pred_region
          %s234 = ssub.s32 1024, 1024
          %235 = vsyncadd [#allocation6], %s234
          %s236 = sshll.u32 [#allocation7], 4
          %s237 = int_to_ptr.vmem [resolvable:$true] %s236
          %242 = dma.hbm_to_vmem [thread:$0]  %s3, 1024, %s237, [#allocation6], 64, 64, 4
        $region24: #{tpu_custom_call.1} parent=11 // pred_fallthru
          _
        // Predicated region
        $region25: #{tpu_custom_call.1} parent=11 // pred_check
          %p243 = pneg %p131
        $region26: #{tpu_custom_call.1} parent=11 // pred_check_branch
          %245 = sbr.rel (%p243) target = $region28
        $region27: #{tpu_custom_call.1} parent=11 // pred_region
          _
        $region28: #{tpu_custom_call.1} parent=11 // pred_fallthru
          _
        // Predicated region
        $region29: #{tpu_custom_call.1} parent=11 // pred_check
          %p246 = pneg %p152
        $region30: #{tpu_custom_call.1} parent=11 // pred_check_branch
          %248 = sbr.rel (%p246) target = $region32
        $region31: #{tpu_custom_call.1} parent=11 // pred_region
          %s250 = ssub.s32 1024, 1024
          %251 = vsyncadd [#allocation9], %s250
          %s252 = sshll.u32 [#allocation8], 4
          %s253 = int_to_ptr.vmem [resolvable:$true] %s252
          %258 = dma.hbm_to_vmem [thread:$0]  %s5, 1024, %s253, [#allocation9], 64, 64, 4
        $region32: #{tpu_custom_call.1} parent=11 // pred_fallthru
          _
        // Predicated region
        $region33: #{tpu_custom_call.1} parent=11 // pred_check
          %p259 = pneg %p173
        $region34: #{tpu_custom_call.1} parent=11 // pred_check_branch
          %261 = sbr.rel (%p259) target = $region36
        $region35: #{tpu_custom_call.1} parent=11 // pred_region
          _
        $region36: #{tpu_custom_call.1} parent=11 // pred_fallthru
          _
      $region12: #{tpu_custom_call.1} parent=5 // pred_fallthru
        _
      %p262 = scmp.lt.s32.totalorder %s21, 2
      // Predicated region
      $region37: #{tpu_custom_call.1} parent=5 // pred_check
        %p263 = pneg %p262
      $region38: #{tpu_custom_call.1} parent=5 // pred_check_branch
        %265 = sbr.rel (%p263) target = $region40
      $region39: #{tpu_custom_call.1} parent=5 // pred_region
        // Predicated region
        $region41: #{tpu_custom_call.1} parent=39 // pred_check
          %p266 = pneg %p41
        $region42: #{tpu_custom_call.1} parent=39 // pred_check_branch
          %268 = sbr.rel (%p266) target = $region44
        $region43: #{tpu_custom_call.1} parent=39 // pred_region
          %s269 = sand.u32 %s31, 1
          %s270 = scalar_lea.sflag [#allocation3], %s269
          %s271 = sand.u32 %s31, 1
          %s272 = smul.addr %s271, 128
          %s273 = scalar_lea.vmem [#allocation2], %s272
          %s274 = smul.u32 16, %s21
          %s276 = ssub.s32 2048, 2048
          %277 = vsyncadd %s270, %s276
          %s278 = smul.addr %s274, 128
          %s279 = scalar_lea.hbm %s0, %s278
          %s280 = sshll.u32 %s273, 4
          %s281 = int_to_ptr.vmem [resolvable:$true] %s280
          %286 = dma.hbm_to_vmem [thread:$0]  %s279, 2048, %s281, %s270, 128, 128, 8
        $region44: #{tpu_custom_call.1} parent=39 // pred_fallthru
          _
      $region40: #{tpu_custom_call.1} parent=5 // pred_fallthru
        _
      %p287 = scmp.le.s32.totalorder 1, %s21
      %p288 = scmp.lt.s32.totalorder %s21, 3
      %p289 = pnand %p287, %p288
      %p290 = pneg %p289
      // Predicated region
      $region45: #{tpu_custom_call.1} parent=5 // pred_check
        _
      $region46: #{tpu_custom_call.1} parent=5 // pred_check_branch
        %292 = sbr.rel (%p289) target = $region48
      $region47: #{tpu_custom_call.1} parent=5 // pred_region
        %s293 = ssub.s32 %s21, 1
        %s294 = sand.u32 %s34, 1
        %s295 = scalar_lea.sflag [#allocation3], %s294
        %s296 = sand.u32 %s34, 1
        %s297 = smul.addr %s296, 128
        %s298 = scalar_lea.vmem [#allocation2], %s297
        // Predicated region
        $region49: #{tpu_custom_call.1} parent=47 // pred_check
          %p299 = pneg %p47
        $region50: #{tpu_custom_call.1} parent=47 // pred_check_branch
          %301 = sbr.rel (%p299) target = $region52
        $region51: #{tpu_custom_call.1} parent=47 // pred_region
          %302 = dma.done %s295, 2048
        $region52: #{tpu_custom_call.1} parent=47 // pred_fallthru
          _
        // Predicated region
        $region53: #{tpu_custom_call.1} parent=47 // pred_check
          %p303 = pneg %p68
        $region54: #{tpu_custom_call.1} parent=47 // pred_check_branch
          %305 = sbr.rel (%p303) target = $region56
        $region55: #{tpu_custom_call.1} parent=47 // pred_region
          %306 = dma.done [#allocation6], 1024
        $region56: #{tpu_custom_call.1} parent=47 // pred_fallthru
          _
        // Predicated region
        $region57: #{tpu_custom_call.1} parent=47 // pred_check
          %p307 = pneg %p110
        $region58: #{tpu_custom_call.1} parent=47 // pred_check_branch
          %309 = sbr.rel (%p307) target = $region60
        $region59: #{tpu_custom_call.1} parent=47 // pred_region
          %310 = dma.done [#allocation6], 1024
        $region60: #{tpu_custom_call.1} parent=47 // pred_fallthru
          _
        // Predicated region
        $region61: #{tpu_custom_call.1} parent=47 // pred_check
          %p311 = pneg %p152
        $region62: #{tpu_custom_call.1} parent=47 // pred_check_branch
          %313 = sbr.rel (%p311) target = $region64
        $region63: #{tpu_custom_call.1} parent=47 // pred_region
          %314 = dma.done [#allocation9], 1024
        $region64: #{tpu_custom_call.1} parent=47 // pred_fallthru
          _
        %s315 = sand.u32 %s34, 1
        %s316 = scalar_lea.sflag [#allocation3], %s315
        %s317 = sand.u32 %s34, 1
        %s318 = smul.addr %s317, 128
        %s319 = scalar_lea.vmem [#allocation2], %s318
        %p320 = pneg %p47
        %p321 = pneg %p44
        %p322 = pneg %p68
        %p323 = pneg %p65
        %p324 = pneg %p89
        %p325 = pneg %p86
        %p326 = pneg %p110
        %p327 = pneg %p107
        %p328 = pneg %p131
        %p329 = pneg %p128
        %p330 = pneg %p152
        %p331 = pneg %p149
        %p332 = pneg %p173
        %p333 = pneg %p170
        %p334 = pneg %p199
        %p335 = pneg %p196
        %s336 = sand.u32 %s186, 1
        %s337 = scalar_lea.sflag [#allocation4], %s336
        %s338 = sand.u32 %s186, 1
        %s339 = smul.addr %s338, 128
        %s340 = scalar_lea.vmem [#allocation10], %s339
        %s341 = smul.u32 16, %s26
        %s342 = smul.u32 16, %s26
        %v344 = vld [vmem:[%s298] sm:$0xff]
        %v345 = vld [vmem:[%s298 + $0x8] sm:$0xff]
        %v346 = vld [vmem:[%s298 + $0x10] sm:$0xff]
        %v347 = vld [vmem:[%s298 + $0x18] sm:$0xff]
        %v348 = vld [vmem:[%s298 + $0x20] sm:$0xff]
        %v349 = vld [vmem:[%s298 + $0x28] sm:$0xff]
        %v350 = vld [vmem:[%s298 + $0x30] sm:$0xff]
        %v351 = vld [vmem:[%s298 + $0x38] sm:$0xff]
        %v352 = vld [vmem:[%s298 + $0x40] sm:$0xff]
        %v353 = vld [vmem:[%s298 + $0x48] sm:$0xff]
        %v354 = vld [vmem:[%s298 + $0x50] sm:$0xff]
        %v355 = vld [vmem:[%s298 + $0x58] sm:$0xff]
        %v356 = vld [vmem:[%s298 + $0x60] sm:$0xff]
        %v357 = vld [vmem:[%s298 + $0x68] sm:$0xff]
        %v358 = vld [vmem:[%s298 + $0x70] sm:$0xff]
        %v359 = vld [vmem:[%s298 + $0x78] sm:$0xff]
        %v360 = vpack.c.bf16 %v345, %v344
        %v361 = vpack.c.bf16 %v347, %v346
        %v362 = vpack.c.bf16 %v349, %v348
        %v363 = vpack.c.bf16 %v351, %v350
        %v364 = vpack.c.bf16 %v353, %v352
        %v365 = vpack.c.bf16 %v355, %v354
        %v366 = vpack.c.bf16 %v357, %v356
        %v367 = vpack.c.bf16 %v359, %v358
        %v368 = vld [vmem:[#allocation5] sm:$0xf]
        %v369 = vld [vmem:[#allocation5 + $0x4] sm:$0xf]
        %v370 = vld [vmem:[#allocation5 + $0x8] sm:$0xf]
        %v371 = vld [vmem:[#allocation5 + $0xc] sm:$0xf]
        %v372 = vld [vmem:[#allocation5 + $0x10] sm:$0xf]
        %v373 = vld [vmem:[#allocation5 + $0x14] sm:$0xf]
        %v374 = vld [vmem:[#allocation5 + $0x18] sm:$0xf]
        %v375 = vld [vmem:[#allocation5 + $0x1c] sm:$0xf]
        %v376 = vld [vmem:[#allocation5 + $0x20] sm:$0xf]
        %v377 = vld [vmem:[#allocation5 + $0x24] sm:$0xf]
        %v378 = vld [vmem:[#allocation5 + $0x28] sm:$0xf]
        %v379 = vld [vmem:[#allocation5 + $0x2c] sm:$0xf]
        %v380 = vld [vmem:[#allocation5 + $0x30] sm:$0xf]
        %v381 = vld [vmem:[#allocation5 + $0x34] sm:$0xf]
        %v382 = vld [vmem:[#allocation5 + $0x38] sm:$0xf]
        %v383 = vld [vmem:[#allocation5 + $0x3c] sm:$0xf]
        %v384 = vld [vmem:[%s2] sm:$0x1]
        %v386 = vlaneseq
        %v387 = vshrl.u32 %v386, 7
        %v388 = vsub.s32 0, %v387
        %v389 = vrot.slane %v384, %v388
        %v407 = vunpack.c.l.b16 %v368
        %v408 = vunpack.c.l.b16 %v369
        %v409 = vunpack.c.l.b16 %v370
        %v410 = vunpack.c.l.b16 %v371
        %v411 = vunpack.c.l.b16 %v372
        %v412 = vunpack.c.l.b16 %v373
        %v413 = vunpack.c.l.b16 %v374
        %v414 = vunpack.c.l.b16 %v375
        %v415 = vunpack.c.l.b16 %v376
        %v416 = vunpack.c.l.b16 %v377
        %v417 = vunpack.c.l.b16 %v378
        %v418 = vunpack.c.l.b16 %v379
        %v419 = vunpack.c.l.b16 %v380
        %v420 = vunpack.c.l.b16 %v381
        %v421 = vunpack.c.l.b16 %v382
        %v422 = vunpack.c.l.b16 %v383
        %v423 = vpack.c.b16 %v408, %v407
        %v424 = vpack.c.b16 %v410, %v409
        %v425 = vpack.c.b16 %v412, %v411
        %v426 = vpack.c.b16 %v414, %v413
        %v427 = vpack.c.b16 %v416, %v415
        %v428 = vpack.c.b16 %v418, %v417
        %v429 = vpack.c.b16 %v420, %v419
        %v430 = vpack.c.b16 %v422, %v421
        %439 = vmatprep.subr.bf16.mxu0 0
        %440 = vmatpush1.bf16.msra.mxu0 %v423
        %441 = vmatprep.subr.bf16.mxu0 0
        %442 = vmatpush1.bf16.msra.mxu0 %v424
        %443 = vmatprep.subr.bf16.mxu0 0
        %444 = vmatpush1.bf16.msra.mxu0 %v425
        %445 = vmatprep.subr.bf16.mxu0 0
        %446 = vmatpush1.bf16.msra.mxu0 %v426
        %447 = vmatprep.subr.bf16.mxu0 0
        %448 = vmatpush1.bf16.msra.mxu0 %v427
        %449 = vmatprep.subr.bf16.mxu0 0
        %450 = vmatpush1.bf16.msra.mxu0 %v428
        %451 = vmatprep.subr.bf16.mxu0 0
        %452 = vmatpush1.bf16.msra.mxu0 %v429
        %453 = vmatprep.subr.bf16.mxu0 0
        %454 = vmatpush1.bf16.msra.mxu0 %v430
        %455 = vmatprep.subr.bf16.mxu0 0
        %456 = vmatpush1.bf16.msra.mxu0 0
        %457 = vmatprep.subr.bf16.mxu0 0
        %458 = vmatpush1.bf16.msra.mxu0 0
        %459 = vmatprep.subr.bf16.mxu0 0
        %460 = vmatpush1.bf16.msra.mxu0 0
        %461 = vmatprep.subr.bf16.mxu0 0
        %462 = vmatpush1.bf16.msra.mxu0 0
        %463 = vmatprep.subr.bf16.mxu0 0
        %464 = vmatpush1.bf16.msra.mxu0 0
        %465 = vmatprep.subr.bf16.mxu0 0
        %466 = vmatpush1.bf16.msra.mxu0 0
        %467 = vmatprep.subr.bf16.mxu0 0
        %468 = vmatpush1.bf16.msra.mxu0 0
        %469 = vmatprep.subr.bf16.mxu0 0
        %470 = vmatpush1.bf16.msra.mxu0 0
        %471 = vmatprep.mubr.bf16.mxu0 0
        %472 = vmatmul.mubr.bf16.gmra.mrb[0].mxu0 %v360
        %v473 = vpop.f32.mrb[0].mxu0
        %v474 = vadd.f32 %v389, %v473
        %v475 = vpop.f32.mrb[0].mxu0
        %v476 = vpop.f32.mrb[0].mxu0
        %v477 = vadd.f32 %v389, %v476
        %v478 = vpop.f32.mrb[0].mxu0
        %479 = vmatprep.mubr.bf16.mxu0 0
        %480 = vmatmul.mubr.bf16.gmra.mrb[0].mxu0 %v361
        %v481 = vpop.f32.mrb[0].mxu0
        %v482 = vadd.f32 %v389, %v481
        %v483 = vpop.f32.mrb[0].mxu0
        %v484 = vpop.f32.mrb[0].mxu0
        %v485 = vadd.f32 %v389, %v484
        %v486 = vpop.f32.mrb[0].mxu0
        %487 = vmatprep.mubr.bf16.mxu0 0
        %488 = vmatmul.mubr.bf16.gmra.mrb[0].mxu0 %v362
        %v489 = vpop.f32.mrb[0].mxu0
        %v490 = vadd.f32 %v389, %v489
        %v491 = vpop.f32.mrb[0].mxu0
        %v492 = vpop.f32.mrb[0].mxu0
        %v493 = vadd.f32 %v389, %v492
        %v494 = vpop.f32.mrb[0].mxu0
        %495 = vmatprep.mubr.bf16.mxu0 0
        %496 = vmatmul.mubr.bf16.gmra.mrb[0].mxu0 %v363
        %v497 = vpop.f32.mrb[0].mxu0
        %v498 = vadd.f32 %v389, %v497
        %v499 = vpop.f32.mrb[0].mxu0
        %v500 = vpop.f32.mrb[0].mxu0
        %v501 = vadd.f32 %v389, %v500
        %v502 = vpop.f32.mrb[0].mxu0
        %503 = vmatprep.mubr.bf16.mxu0 0
        %504 = vmatmul.mubr.bf16.gmra.mrb[0].mxu0 %v364
        %v505 = vpop.f32.mrb[0].mxu0
        %v506 = vadd.f32 %v389, %v505
        %v507 = vpop.f32.mrb[0].mxu0
        %v508 = vpop.f32.mrb[0].mxu0
        %v509 = vadd.f32 %v389, %v508
        %v510 = vpop.f32.mrb[0].mxu0
        %511 = vmatprep.mubr.bf16.mxu0 0
        %512 = vmatmul.mubr.bf16.gmra.mrb[0].mxu0 %v365
        %v513 = vpop.f32.mrb[0].mxu0
        %v514 = vadd.f32 %v389, %v513
        %v515 = vpop.f32.mrb[0].mxu0
        %v516 = vpop.f32.mrb[0].mxu0
        %v517 = vadd.f32 %v389, %v516
        %v518 = vpop.f32.mrb[0].mxu0
        %519 = vmatprep.mubr.bf16.mxu0 0
        %520 = vmatmul.mubr.bf16.gmra.mrb[0].mxu0 %v366
        %v521 = vpop.f32.mrb[0].mxu0
        %v522 = vadd.f32 %v389, %v521
        %v523 = vpop.f32.mrb[0].mxu0
        %v524 = vpop.f32.mrb[0].mxu0
        %v525 = vadd.f32 %v389, %v524
        %v526 = vpop.f32.mrb[0].mxu0
        %527 = vmatprep.mubr.bf16.mxu0 0
        %528 = vmatmul.mubr.bf16.gmra.mrb[0].mxu0 %v367
        %v529 = vpop.f32.mrb[0].mxu0
        %v530 = vadd.f32 %v389, %v529
        %v531 = vpop.f32.mrb[0].mxu0
        %v532 = vpop.f32.mrb[0].mxu0
        %v533 = vadd.f32 %v389, %v532
        %v534 = vpop.f32.mrb[0].mxu0
        %535 = vdwg.mxu0
        %v536 = vmax.f32 %v474, 0.0
        %v537 = vmax.f32 %v477, 0.0
        %v538 = vmax.f32 %v482, 0.0
        %v539 = vmax.f32 %v485, 0.0
        %v540 = vmax.f32 %v490, 0.0
        %v541 = vmax.f32 %v493, 0.0
        %v542 = vmax.f32 %v498, 0.0
        %v543 = vmax.f32 %v501, 0.0
        %v544 = vmax.f32 %v506, 0.0
        %v545 = vmax.f32 %v509, 0.0
        %v546 = vmax.f32 %v514, 0.0
        %v547 = vmax.f32 %v517, 0.0
        %v548 = vmax.f32 %v522, 0.0
        %v549 = vmax.f32 %v525, 0.0
        %v550 = vmax.f32 %v530, 0.0
        %v551 = vmax.f32 %v533, 0.0
        %v552 = vpack.c.bf16 %v537, %v536
        %v553 = vpack.c.bf16 %v539, %v538
        %v554 = vpack.c.bf16 %v541, %v540
        %v555 = vpack.c.bf16 %v543, %v542
        %v556 = vpack.c.bf16 %v545, %v544
        %v557 = vpack.c.bf16 %v547, %v546
        %v558 = vpack.c.bf16 %v549, %v548
        %v559 = vpack.c.bf16 %v551, %v550
        %v560 = vld [vmem:[#allocation7] sm:$0xf]
        %v561 = vld [vmem:[#allocation7 + $0x4] sm:$0xf]
        %v562 = vld [vmem:[#allocation7 + $0x8] sm:$0xf]
        %v563 = vld [vmem:[#allocation7 + $0xc] sm:$0xf]
        %v564 = vld [vmem:[#allocation7 + $0x10] sm:$0xf]
        %v565 = vld [vmem:[#allocation7 + $0x14] sm:$0xf]
        %v566 = vld [vmem:[#allocation7 + $0x18] sm:$0xf]
        %v567 = vld [vmem:[#allocation7 + $0x1c] sm:$0xf]
        %v568 = vld [vmem:[#allocation7 + $0x20] sm:$0xf]
        %v569 = vld [vmem:[#allocation7 + $0x24] sm:$0xf]
        %v570 = vld [vmem:[#allocation7 + $0x28] sm:$0xf]
        %v571 = vld [vmem:[#allocation7 + $0x2c] sm:$0xf]
        %v572 = vld [vmem:[#allocation7 + $0x30] sm:$0xf]
        %v573 = vld [vmem:[#allocation7 + $0x34] sm:$0xf]
        %v574 = vld [vmem:[#allocation7 + $0x38] sm:$0xf]
        %v575 = vld [vmem:[#allocation7 + $0x3c] sm:$0xf]
        %v576 = vld [vmem:[%s4] sm:$0x1]
        %v578 = vlaneseq
        %v579 = vshrl.u32 %v578, 7
        %v580 = vsub.s32 0, %v579
        %v581 = vrot.slane %v576, %v580
        %v599 = vunpack.c.l.b16 %v560
        %v600 = vunpack.c.l.b16 %v561
        %v601 = vunpack.c.l.b16 %v562
        %v602 = vunpack.c.l.b16 %v563
        %v603 = vunpack.c.l.b16 %v564
        %v604 = vunpack.c.l.b16 %v565
        %v605 = vunpack.c.l.b16 %v566
        %v606 = vunpack.c.l.b16 %v567
        %v607 = vunpack.c.l.b16 %v568
        %v608 = vunpack.c.l.b16 %v569
        %v609 = vunpack.c.l.b16 %v570
        %v610 = vunpack.c.l.b16 %v571
        %v611 = vunpack.c.l.b16 %v572
        %v612 = vunpack.c.l.b16 %v573
        %v613 = vunpack.c.l.b16 %v574
        %v614 = vunpack.c.l.b16 %v575
        %v615 = vpack.c.b16 %v600, %v599
        %v616 = vpack.c.b16 %v602, %v601
        %v617 = vpack.c.b16 %v604, %v603
        %v618 = vpack.c.b16 %v606, %v605
        %v619 = vpack.c.b16 %v608, %v607
        %v620 = vpack.c.b16 %v610, %v609
        %v621 = vpack.c.b16 %v612, %v611
        %v622 = vpack.c.b16 %v614, %v613
        %631 = vmatprep.subr.bf16.mxu0 0
        %632 = vmatpush1.bf16.msra.mxu0 %v615
        %633 = vmatprep.subr.bf16.mxu0 0
        %634 = vmatpush1.bf16.msra.mxu0 %v616
        %635 = vmatprep.subr.bf16.mxu0 0
        %636 = vmatpush1.bf16.msra.mxu0 %v617
        %637 = vmatprep.subr.bf16.mxu0 0
        %638 = vmatpush1.bf16.msra.mxu0 %v618
        %639 = vmatprep.subr.bf16.mxu0 0
        %640 = vmatpush1.bf16.msra.mxu0 %v619
        %641 = vmatprep.subr.bf16.mxu0 0
        %642 = vmatpush1.bf16.msra.mxu0 %v620
        %643 = vmatprep.subr.bf16.mxu0 0
        %644 = vmatpush1.bf16.msra.mxu0 %v621
        %645 = vmatprep.subr.bf16.mxu0 0
        %646 = vmatpush1.bf16.msra.mxu0 %v622
        %647 = vmatprep.subr.bf16.mxu0 0
        %648 = vmatpush1.bf16.msra.mxu0 0
        %649 = vmatprep.subr.bf16.mxu0 0
        %650 = vmatpush1.bf16.msra.mxu0 0
        %651 = vmatprep.subr.bf16.mxu0 0
        %652 = vmatpush1.bf16.msra.mxu0 0
        %653 = vmatprep.subr.bf16.mxu0 0
        %654 = vmatpush1.bf16.msra.mxu0 0
        %655 = vmatprep.subr.bf16.mxu0 0
        %656 = vmatpush1.bf16.msra.mxu0 0
        %657 = vmatprep.subr.bf16.mxu0 0
        %658 = vmatpush1.bf16.msra.mxu0 0
        %659 = vmatprep.subr.bf16.mxu0 0
        %660 = vmatpush1.bf16.msra.mxu0 0
        %661 = vmatprep.subr.bf16.mxu0 0
        %662 = vmatpush1.bf16.msra.mxu0 0
        %663 = vmatprep.mubr.bf16.mxu0 0
        %664 = vmatmul.mubr.bf16.gmra.mrb[0].mxu0 %v552
        %v665 = vpop.f32.mrb[0].mxu0
        %v666 = vadd.f32 %v581, %v665
        %v667 = vpop.f32.mrb[0].mxu0
        %v668 = vpop.f32.mrb[0].mxu0
        %v669 = vadd.f32 %v581, %v668
        %v670 = vpop.f32.mrb[0].mxu0
        %671 = vmatprep.mubr.bf16.mxu0 0
        %672 = vmatmul.mubr.bf16.gmra.mrb[0].mxu0 %v553
        %v673 = vpop.f32.mrb[0].mxu0
        %v674 = vadd.f32 %v581, %v673
        %v675 = vpop.f32.mrb[0].mxu0
        %v676 = vpop.f32.mrb[0].mxu0
        %v677 = vadd.f32 %v581, %v676
        %v678 = vpop.f32.mrb[0].mxu0
        %679 = vmatprep.mubr.bf16.mxu0 0
        %680 = vmatmul.mubr.bf16.gmra.mrb[0].mxu0 %v554
        %v681 = vpop.f32.mrb[0].mxu0
        %v682 = vadd.f32 %v581, %v681
        %v683 = vpop.f32.mrb[0].mxu0
        %v684 = vpop.f32.mrb[0].mxu0
        %v685 = vadd.f32 %v581, %v684
        %v686 = vpop.f32.mrb[0].mxu0
        %687 = vmatprep.mubr.bf16.mxu0 0
        %688 = vmatmul.mubr.bf16.gmra.mrb[0].mxu0 %v555
        %v689 = vpop.f32.mrb[0].mxu0
        %v690 = vadd.f32 %v581, %v689
        %v691 = vpop.f32.mrb[0].mxu0
        %v692 = vpop.f32.mrb[0].mxu0
        %v693 = vadd.f32 %v581, %v692
        %v694 = vpop.f32.mrb[0].mxu0
        %695 = vmatprep.mubr.bf16.mxu0 0
        %696 = vmatmul.mubr.bf16.gmra.mrb[0].mxu0 %v556
        %v697 = vpop.f32.mrb[0].mxu0
        %v698 = vadd.f32 %v581, %v697
        %v699 = vpop.f32.mrb[0].mxu0
        %v700 = vpop.f32.mrb[0].mxu0
        %v701 = vadd.f32 %v581, %v700
        %v702 = vpop.f32.mrb[0].mxu0
        %703 = vmatprep.mubr.bf16.mxu0 0
        %704 = vmatmul.mubr.bf16.gmra.mrb[0].mxu0 %v557
        %v705 = vpop.f32.mrb[0].mxu0
        %v706 = vadd.f32 %v581, %v705
        %v707 = vpop.f32.mrb[0].mxu0
        %v708 = vpop.f32.mrb[0].mxu0
        %v709 = vadd.f32 %v581, %v708
        %v710 = vpop.f32.mrb[0].mxu0
        %711 = vmatprep.mubr.bf16.mxu0 0
        %712 = vmatmul.mubr.bf16.gmra.mrb[0].mxu0 %v558
        %v713 = vpop.f32.mrb[0].mxu0
        %v714 = vadd.f32 %v581, %v713
        %v715 = vpop.f32.mrb[0].mxu0
        %v716 = vpop.f32.mrb[0].mxu0
        %v717 = vadd.f32 %v581, %v716
        %v718 = vpop.f32.mrb[0].mxu0
        %719 = vmatprep.mubr.bf16.mxu0 0
        %720 = vmatmul.mubr.bf16.gmra.mrb[0].mxu0 %v559
        %v721 = vpop.f32.mrb[0].mxu0
        %v722 = vadd.f32 %v581, %v721
        %v723 = vpop.f32.mrb[0].mxu0
        %v724 = vpop.f32.mrb[0].mxu0
        %v725 = vadd.f32 %v581, %v724
        %v726 = vpop.f32.mrb[0].mxu0
        %727 = vdwg.mxu0
        %v728 = vmax.f32 %v666, 0.0
        %v729 = vmax.f32 %v669, 0.0
        %v730 = vmax.f32 %v674, 0.0
        %v731 = vmax.f32 %v677, 0.0
        %v732 = vmax.f32 %v682, 0.0
        %v733 = vmax.f32 %v685, 0.0
        %v734 = vmax.f32 %v690, 0.0
        %v735 = vmax.f32 %v693, 0.0
        %v736 = vmax.f32 %v698, 0.0
        %v737 = vmax.f32 %v701, 0.0
        %v738 = vmax.f32 %v706, 0.0
        %v739 = vmax.f32 %v709, 0.0
        %v740 = vmax.f32 %v714, 0.0
        %v741 = vmax.f32 %v717, 0.0
        %v742 = vmax.f32 %v722, 0.0
        %v743 = vmax.f32 %v725, 0.0
        %v744 = vpack.c.bf16 %v729, %v728
        %v745 = vpack.c.bf16 %v731, %v730
        %v746 = vpack.c.bf16 %v733, %v732
        %v747 = vpack.c.bf16 %v735, %v734
        %v748 = vpack.c.bf16 %v737, %v736
        %v749 = vpack.c.bf16 %v739, %v738
        %v750 = vpack.c.bf16 %v741, %v740
        %v751 = vpack.c.bf16 %v743, %v742
        %v752 = vld [vmem:[#allocation8] sm:$0xf]
        %v753 = vld [vmem:[#allocation8 + $0x4] sm:$0xf]
        %v754 = vld [vmem:[#allocation8 + $0x8] sm:$0xf]
        %v755 = vld [vmem:[#allocation8 + $0xc] sm:$0xf]
        %v756 = vld [vmem:[#allocation8 + $0x10] sm:$0xf]
        %v757 = vld [vmem:[#allocation8 + $0x14] sm:$0xf]
        %v758 = vld [vmem:[#allocation8 + $0x18] sm:$0xf]
        %v759 = vld [vmem:[#allocation8 + $0x1c] sm:$0xf]
        %v760 = vld [vmem:[#allocation8 + $0x20] sm:$0xf]
        %v761 = vld [vmem:[#allocation8 + $0x24] sm:$0xf]
        %v762 = vld [vmem:[#allocation8 + $0x28] sm:$0xf]
        %v763 = vld [vmem:[#allocation8 + $0x2c] sm:$0xf]
        %v764 = vld [vmem:[#allocation8 + $0x30] sm:$0xf]
        %v765 = vld [vmem:[#allocation8 + $0x34] sm:$0xf]
        %v766 = vld [vmem:[#allocation8 + $0x38] sm:$0xf]
        %v767 = vld [vmem:[#allocation8 + $0x3c] sm:$0xf]
        %v768 = vld [vmem:[%s6] sm:$0x1]
        %v770 = vlaneseq
        %v771 = vshrl.u32 %v770, 7
        %v772 = vsub.s32 0, %v771
        %v773 = vrot.slane %v768, %v772
        %v791 = vunpack.c.l.b16 %v752
        %v792 = vunpack.c.l.b16 %v753
        %v793 = vunpack.c.l.b16 %v754
        %v794 = vunpack.c.l.b16 %v755
        %v795 = vunpack.c.l.b16 %v756
        %v796 = vunpack.c.l.b16 %v757
        %v797 = vunpack.c.l.b16 %v758
        %v798 = vunpack.c.l.b16 %v759
        %v799 = vunpack.c.l.b16 %v760
        %v800 = vunpack.c.l.b16 %v761
        %v801 = vunpack.c.l.b16 %v762
        %v802 = vunpack.c.l.b16 %v763
        %v803 = vunpack.c.l.b16 %v764
        %v804 = vunpack.c.l.b16 %v765
        %v805 = vunpack.c.l.b16 %v766
        %v806 = vunpack.c.l.b16 %v767
        %v807 = vpack.c.b16 %v792, %v791
        %v808 = vpack.c.b16 %v794, %v793
        %v809 = vpack.c.b16 %v796, %v795
        %v810 = vpack.c.b16 %v798, %v797
        %v811 = vpack.c.b16 %v800, %v799
        %v812 = vpack.c.b16 %v802, %v801
        %v813 = vpack.c.b16 %v804, %v803
        %v814 = vpack.c.b16 %v806, %v805
        %823 = vmatprep.subr.bf16.mxu0 0
        %824 = vmatpush1.bf16.msra.mxu0 %v807
        %825 = vmatprep.subr.bf16.mxu0 0
        %826 = vmatpush1.bf16.msra.mxu0 %v808
        %827 = vmatprep.subr.bf16.mxu0 0
        %828 = vmatpush1.bf16.msra.mxu0 %v809
        %829 = vmatprep.subr.bf16.mxu0 0
        %830 = vmatpush1.bf16.msra.mxu0 %v810
        %831 = vmatprep.subr.bf16.mxu0 0
        %832 = vmatpush1.bf16.msra.mxu0 %v811
        %833 = vmatprep.subr.bf16.mxu0 0
        %834 = vmatpush1.bf16.msra.mxu0 %v812
        %835 = vmatprep.subr.bf16.mxu0 0
        %836 = vmatpush1.bf16.msra.mxu0 %v813
        %837 = vmatprep.subr.bf16.mxu0 0
        %838 = vmatpush1.bf16.msra.mxu0 %v814
        %839 = vmatprep.subr.bf16.mxu0 0
        %840 = vmatpush1.bf16.msra.mxu0 0
        %841 = vmatprep.subr.bf16.mxu0 0
        %842 = vmatpush1.bf16.msra.mxu0 0
        %843 = vmatprep.subr.bf16.mxu0 0
        %844 = vmatpush1.bf16.msra.mxu0 0
        %845 = vmatprep.subr.bf16.mxu0 0
        %846 = vmatpush1.bf16.msra.mxu0 0
        %847 = vmatprep.subr.bf16.mxu0 0
        %848 = vmatpush1.bf16.msra.mxu0 0
        %849 = vmatprep.subr.bf16.mxu0 0
        %850 = vmatpush1.bf16.msra.mxu0 0
        %851 = vmatprep.subr.bf16.mxu0 0
        %852 = vmatpush1.bf16.msra.mxu0 0
        %853 = vmatprep.subr.bf16.mxu0 0
        %854 = vmatpush1.bf16.msra.mxu0 0
        %855 = vmatprep.mubr.bf16.mxu0 0
        %856 = vmatmul.mubr.bf16.gmra.mrb[0].mxu0 %v744
        %v857 = vpop.f32.mrb[0].mxu0
        %v858 = vadd.f32 %v773, %v857
        %v859 = vpop.f32.mrb[0].mxu0
        %v860 = vpop.f32.mrb[0].mxu0
        %v861 = vadd.f32 %v773, %v860
        %v862 = vpop.f32.mrb[0].mxu0
        %863 = vmatprep.mubr.bf16.mxu0 0
        %864 = vmatmul.mubr.bf16.gmra.mrb[0].mxu0 %v745
        %v865 = vpop.f32.mrb[0].mxu0
        %v866 = vadd.f32 %v773, %v865
        %v867 = vpop.f32.mrb[0].mxu0
        %v868 = vpop.f32.mrb[0].mxu0
        %v869 = vadd.f32 %v773, %v868
        %v870 = vpop.f32.mrb[0].mxu0
        %871 = vmatprep.mubr.bf16.mxu0 0
        %872 = vmatmul.mubr.bf16.gmra.mrb[0].mxu0 %v746
        %v873 = vpop.f32.mrb[0].mxu0
        %v874 = vadd.f32 %v773, %v873
        %v875 = vpop.f32.mrb[0].mxu0
        %v876 = vpop.f32.mrb[0].mxu0
        %v877 = vadd.f32 %v773, %v876
        %v878 = vpop.f32.mrb[0].mxu0
        %879 = vmatprep.mubr.bf16.mxu0 0
        %880 = vmatmul.mubr.bf16.gmra.mrb[0].mxu0 %v747
        %v881 = vpop.f32.mrb[0].mxu0
        %v882 = vadd.f32 %v773, %v881
        %v883 = vpop.f32.mrb[0].mxu0
        %v884 = vpop.f32.mrb[0].mxu0
        %v885 = vadd.f32 %v773, %v884
        %v886 = vpop.f32.mrb[0].mxu0
        %887 = vmatprep.mubr.bf16.mxu0 0
        %888 = vmatmul.mubr.bf16.gmra.mrb[0].mxu0 %v748
        %v889 = vpop.f32.mrb[0].mxu0
        %v890 = vadd.f32 %v773, %v889
        %v891 = vpop.f32.mrb[0].mxu0
        %v892 = vpop.f32.mrb[0].mxu0
        %v893 = vadd.f32 %v773, %v892
        %v894 = vpop.f32.mrb[0].mxu0
        %895 = vmatprep.mubr.bf16.mxu0 0
        %896 = vmatmul.mubr.bf16.gmra.mrb[0].mxu0 %v749
        %v897 = vpop.f32.mrb[0].mxu0
        %v898 = vadd.f32 %v773, %v897
        %v899 = vpop.f32.mrb[0].mxu0
        %v900 = vpop.f32.mrb[0].mxu0
        %v901 = vadd.f32 %v773, %v900
        %v902 = vpop.f32.mrb[0].mxu0
        %903 = vmatprep.mubr.bf16.mxu0 0
        %904 = vmatmul.mubr.bf16.gmra.mrb[0].mxu0 %v750
        %v905 = vpop.f32.mrb[0].mxu0
        %v906 = vadd.f32 %v773, %v905
        %v907 = vpop.f32.mrb[0].mxu0
        %v908 = vpop.f32.mrb[0].mxu0
        %v909 = vadd.f32 %v773, %v908
        %v910 = vpop.f32.mrb[0].mxu0
        %911 = vmatprep.mubr.bf16.mxu0 0
        %912 = vmatmul.mubr.bf16.gmra.mrb[0].mxu0 %v751
        %v913 = vpop.f32.mrb[0].mxu0
        %v914 = vadd.f32 %v773, %v913
        %v915 = vpop.f32.mrb[0].mxu0
        %v916 = vpop.f32.mrb[0].mxu0
        %v917 = vadd.f32 %v773, %v916
        %v918 = vpop.f32.mrb[0].mxu0
        %919 = vdwg.mxu0
        %920 = vst [vmem:[%s340] sm:$0xff] %v858
        %921 = vst [vmem:[%s340 + $0x8] sm:$0xff] %v861
        %922 = vst [vmem:[%s340 + $0x10] sm:$0xff] %v866
        %923 = vst [vmem:[%s340 + $0x18] sm:$0xff] %v869
        %924 = vst [vmem:[%s340 + $0x20] sm:$0xff] %v874
        %925 = vst [vmem:[%s340 + $0x28] sm:$0xff] %v877
        %926 = vst [vmem:[%s340 + $0x30] sm:$0xff] %v882
        %927 = vst [vmem:[%s340 + $0x38] sm:$0xff] %v885
        %928 = vst [vmem:[%s340 + $0x40] sm:$0xff] %v890
        %929 = vst [vmem:[%s340 + $0x48] sm:$0xff] %v893
        %930 = vst [vmem:[%s340 + $0x50] sm:$0xff] %v898
        %931 = vst [vmem:[%s340 + $0x58] sm:$0xff] %v901
        %932 = vst [vmem:[%s340 + $0x60] sm:$0xff] %v906
        %933 = vst [vmem:[%s340 + $0x68] sm:$0xff] %v909
        %934 = vst [vmem:[%s340 + $0x70] sm:$0xff] %v914
        %935 = vst [vmem:[%s340 + $0x78] sm:$0xff] %v917
        %s936 = sand.u32 %s186, 1
        %s937 = scalar_lea.sflag [#allocation4], %s936
        %s938 = sand.u32 %s186, 1
        %s939 = smul.addr %s938, 128
        %s940 = scalar_lea.vmem [#allocation10], %s939
        // Predicated region
        $region65: #{tpu_custom_call.1} parent=47 // pred_check
          %p941 = pneg %p196
        $region66: #{tpu_custom_call.1} parent=47 // pred_check_branch
          %943 = sbr.rel (%p941) target = $region68
        $region67: #{tpu_custom_call.1} parent=47 // pred_region
          %s944 = smul.u32 16, %s26
          %s946 = ssub.s32 2048, 2048
          %947 = vsyncadd %s937, %s946
          %s948 = smul.addr %s944, 128
          %s949 = scalar_lea.hbm %s7, %s948
          %s950 = sshll.u32 %s940, 4
          %s951 = int_to_ptr.vmem [resolvable:$true] %s950
          %956 = dma.vmem_to_hbm [thread:$0]  %s951, 2048, %s949, %s937, 128, 128, 8
        $region68: #{tpu_custom_call.1} parent=47 // pred_fallthru
          _
      $region48: #{tpu_custom_call.1} parent=5 // pred_fallthru
        _
      %p957 = scmp.le.s32.totalorder 2, %s21
      // Predicated region
      $region69: #{tpu_custom_call.1} parent=5 // pred_check
        %p958 = pneg %p957
      $region70: #{tpu_custom_call.1} parent=5 // pred_check_branch
        %960 = sbr.rel (%p958) target = $region72
      $region71: #{tpu_custom_call.1} parent=5 // pred_region
        %s961 = ssub.s32 %s21, 2
        // Predicated region
        $region73: #{tpu_custom_call.1} parent=71 // pred_check
          %p962 = pneg %p202
        $region74: #{tpu_custom_call.1} parent=71 // pred_check_branch
          %964 = sbr.rel (%p962) target = $region76
        $region75: #{tpu_custom_call.1} parent=71 // pred_region
          %s965 = sand.u32 %s187, 1
          %s966 = scalar_lea.sflag [#allocation4], %s965
          %s967 = sand.u32 %s187, 1
          %s968 = smul.addr %s967, 128
          %s969 = scalar_lea.vmem [#allocation10], %s968
          %970 = dma.done %s966, 2048
        $region76: #{tpu_custom_call.1} parent=71 // pred_fallthru
          _
      $region72: #{tpu_custom_call.1} parent=5 // pred_fallthru
        _
    $region6: #{tpu_custom_call.1} parent=1 // loop_footer
      %s25 = sadd.s32 1, %s21
    $region7: #{tpu_custom_call.1} parent=1 // loop_footer_branch
      %20 = sbr.rel target = $region3
    $region8: #{tpu_custom_call.1} parent=1 // loop_exit
      _
    %971 = vsyncpa [#allocation3], 1
    %s972 = scalar_lea.sflag [#allocation3], 1
    %973 = vsyncpa %s972, 1
    %974 = vsyncpa [#allocation6], 1
    %975 = vsyncpa [#allocation9], 1
    %976 = vsyncpa [#allocation4], 1
    %s977 = scalar_lea.sflag [#allocation4], 1
    %978 = vsyncpa %s977, 1

</llo_original>
